<compile_context>
chip_gen: v7x
topology: tpu7x:2x2x1
jax: 0.10.0
libtpu: 0.0.40
codegen_flags: <defaults>
</compile_context>

<pallas_src>
import functools

import jax
import jax.numpy as jnp
from jax.experimental import pallas as pl
from jax.experimental.pallas import tpu as pltpu


def _net_kernel(x_ref, w1_ref, b1_ref, w2_ref, b2_ref, w3_ref, b3_ref, o_ref):
    # Layer 1: Linear + tanh  (bf16 MXU inputs, f32 accumulate + f32 elementwise)
    h1 = jnp.dot(x_ref[...], w1_ref[...], preferred_element_type=jnp.float32)
    h1 = jnp.tanh(h1 + b1_ref[...])

    # Layer 2: Linear + leaky_relu (PyTorch default negative_slope = 0.01)
    h2 = jnp.dot(h1.astype(w2_ref.dtype), w2_ref[...],
                 preferred_element_type=jnp.float32)
    h2 = h2 + b2_ref[...]
    h2 = jnp.where(h2 >= 0, h2, 0.01 * h2)

    # Output layer: Linear + tanh
    o = jnp.dot(h2.astype(w3_ref.dtype), w3_ref[...],
                preferred_element_type=jnp.float32)
    o_ref[...] = jnp.tanh(o + b3_ref[...]).astype(o_ref.dtype)


def _rup(n, m):
    return ((n + m - 1) // m) * m


def _pad2d(a, rows, cols):
    return jnp.pad(a, ((0, rows - a.shape[0]), (0, cols - a.shape[1])))


@functools.partial(jax.jit, static_argnames=("block_b", "mxu_dtype"))
def net_forward(x, w1, b1, w2, b2, w3, b3, *, block_b=256,
                mxu_dtype=jnp.bfloat16):
    """Fused 3-layer MLP forward, batch-tiled with VMEM-resident weights."""
    batch, n_feature = x.shape
    n_h1 = w1.shape[1]
    n_h2 = w2.shape[1]
    n_out = w3.shape[1]

    # Lane-pad all contracted / output dims to multiples of 128 (lane-dense
    # MXU feeds + unmasked output stores).
    f_p = _rup(n_feature, 128)
    h1_p = _rup(n_h1, 128)
    h2_p = _rup(n_h2, 128)
    o_p = _rup(n_out, 128)

    # Batch tile: multiple of 8 sublanes, capped at block_b; pad batch up to it.
    tb = max(8, min(_rup(block_b, 8), _rup(batch, 8)))
    b_p = _rup(batch, tb)

    # Zero-pad (exact for a Linear stack) and cast matmul operands for the MXU.
    x_p = _pad2d(x, b_p, f_p).astype(mxu_dtype)
    w1_p = _pad2d(w1, f_p, h1_p).astype(mxu_dtype)
    w2_p = _pad2d(w2, h1_p, h2_p).astype(mxu_dtype)
    w3_p = _pad2d(w3, h2_p, o_p).astype(mxu_dtype)
    # Biases stay f32; reshaped once to (1, H) here (not per grid step).
    b1_p = _pad2d(b1.reshape(1, -1), 1, h1_p)
    b2_p = _pad2d(b2.reshape(1, -1), 1, h2_p)
    b3_p = _pad2d(b3.reshape(1, -1), 1, o_p)

    # Weights/biases: constant index_map -> DMA'd once, resident in VMEM.
    resident = lambda shape: pl.BlockSpec(shape, lambda i: (0, 0))

    out_p = pl.pallas_call(
        _net_kernel,
        out_shape=jax.ShapeDtypeStruct((b_p, o_p), jnp.float32),
        grid=(b_p // tb,),
        in_specs=[
            pl.BlockSpec((tb, f_p), lambda i: (i, 0)),   # x: batch-tiled, pipelined
            resident((f_p, h1_p)), resident((1, h1_p)),
            resident((h1_p, h2_p)), resident((1, h2_p)),
            resident((h2_p, o_p)), resident((1, o_p)),
        ],
        out_specs=pl.BlockSpec((tb, o_p), lambda i: (i, 0)),
        compiler_params=pltpu.CompilerParams(
            dimension_semantics=("parallel",)),
    )(x_p, w1_p, b1_p, w2_p, b2_p, w3_p, b3_p)

    # Strip batch / lane padding.
    return out_p[:batch, :n_out]


def init_linear(key, fan_in, fan_out):
    """torch.nn.Linear-style init (uniform +/- 1/sqrt(fan_in)).
    Returns W as [in, out] (transposed vs PyTorch's [out, in] storage)."""
    kw, kb = jax.random.split(key)
    bound = 1.0 / jnp.sqrt(fan_in)
    w = jax.random.uniform(kw, (fan_in, fan_out), jnp.float32, -bound, bound)
    b = jax.random.uniform(kb, (fan_out,), jnp.float32, -bound, bound)
    return w, b


if __name__ == "__main__":
    # Shapes consistent with Net(n_feature, n_hidden1, n_hidden2, n_output).
    # Batch is non-multiple of the tile to exercise padding; still tiny data.
    batch, n_feature, n_hidden1, n_hidden2, n_output = 500, 32, 64, 64, 16

    key = jax.random.PRNGKey(0)
    kx, k1, k2, k3 = jax.random.split(key, 4)

    x = jax.random.normal(kx, (batch, n_feature), jnp.float32)
    w1, b1 = init_linear(k1, n_feature, n_hidden1)
    w2, b2 = init_linear(k2, n_hidden1, n_hidden2)
    w3, b3 = init_linear(k3, n_hidden2, n_output)

    out = net_forward(x, w1, b1, w2, b2, w3, b3, block_b=256)
    jax.block_until_ready(out)
    assert out.shape == (batch, n_output)

    # Reference 1: same math as the kernel (bf16 MXU inputs, f32 accumulate /
    # elementwise) -> tight tolerance.
    xb = x.astype(jnp.bfloat16)
    w1b, w2b, w3b = (w.astype(jnp.bfloat16) for w in (w1, w2, w3))
    h1 = jnp.tanh(jnp.dot(xb, w1b, preferred_element_type=jnp.float32) + b1)
    h2 = jnp.dot(h1.astype(jnp.bfloat16), w2b,
                 preferred_element_type=jnp.float32) + b2
    h2 = jnp.where(h2 >= 0, h2, 0.01 * h2)
    ref = jnp.tanh(jnp.dot(h2.astype(jnp.bfloat16), w3b,
                           preferred_element_type=jnp.float32) + b3)
    assert jnp.allclose(out, ref, atol=2e-3, rtol=2e-3)

    # Reference 2: exact f32 PyTorch forward -> loose tolerance (bf16 MXU inputs
    # are an intentional precision/throughput trade-off).
    h1f = jnp.tanh(x @ w1 + b1)
    h2f = h1f @ w2 + b2
    h2f = jnp.where(h2f >= 0, h2f, 0.01 * h2f)
    reff = jnp.tanh(h2f @ w3 + b3)
    assert float(jnp.max(jnp.abs(out - reff))) < 1e-1

    print("KERNEL_OK")
</pallas_src>

<mosaic_0001>
module attributes {stable_mosaic.version = 11 : i64} {
  func.func @_net_kernel(%arg0: i32, %arg1: memref<256x128xbf16, #tpu.memory_space<vmem>>, %arg2: memref<128x128xbf16, #tpu.memory_space<vmem>>, %arg3: memref<1x128xf32, #tpu.memory_space<vmem>>, %arg4: memref<128x128xbf16, #tpu.memory_space<vmem>>, %arg5: memref<1x128xf32, #tpu.memory_space<vmem>>, %arg6: memref<128x128xbf16, #tpu.memory_space<vmem>>, %arg7: memref<1x128xf32, #tpu.memory_space<vmem>>, %arg8: memref<256x128xf32, #tpu.memory_space<vmem>>) attributes {dimension_semantics = [#tpu.dimension_semantics<parallel>], iteration_bounds = array<i64: 2>, scalar_prefetch = 0 : i64, scratch_operands = 0 : i64, tpu.core_type = #tpu.core_type<tc>, window_params = [{transform_indices = @transform_0, window_bounds = array<i64: 256, 128>}, {pipeline_mode = #tpu.pipeline_mode<synchronous>, transform_indices = @transform_1, window_bounds = array<i64: 128, 128>}, {pipeline_mode = #tpu.pipeline_mode<synchronous>, transform_indices = @transform_2, window_bounds = array<i64: 1, 128>}, {pipeline_mode = #tpu.pipeline_mode<synchronous>, transform_indices = @transform_3, window_bounds = array<i64: 128, 128>}, {pipeline_mode = #tpu.pipeline_mode<synchronous>, transform_indices = @transform_4, window_bounds = array<i64: 1, 128>}, {pipeline_mode = #tpu.pipeline_mode<synchronous>, transform_indices = @transform_5, window_bounds = array<i64: 128, 128>}, {pipeline_mode = #tpu.pipeline_mode<synchronous>, transform_indices = @transform_6, window_bounds = array<i64: 1, 128>}, {transform_indices = @transform_7, window_bounds = array<i64: 256, 128>}]} {
    %c0 = arith.constant 0 : index
    %c0_0 = arith.constant 0 : index
    %0 = vector.load %arg1[%c0, %c0_0] : memref<256x128xbf16, #tpu.memory_space<vmem>>, vector<256x128xbf16>
    %c0_1 = arith.constant 0 : index
    %c0_2 = arith.constant 0 : index
    %1 = vector.load %arg2[%c0_1, %c0_2] : memref<128x128xbf16, #tpu.memory_space<vmem>>, vector<128x128xbf16>
    %cst = arith.constant dense<0.000000e+00> : vector<256x128xf32>
    %2 = tpu.matmul %0, %1, %cst {dimension_numbers = #tpu.dot_dimension_numbers<[1], [0], [0], [1], [0, 0, 1, 1], [], []>} : vector<256x128xbf16>, vector<128x128xbf16>, vector<256x128xf32> -> vector<256x128xf32>
    %c0_3 = arith.constant 0 : index
    %c0_4 = arith.constant 0 : index
    %3 = vector.load %arg3[%c0_3, %c0_4] : memref<1x128xf32, #tpu.memory_space<vmem>>, vector<1x128xf32>
    %4 = vector.broadcast %3 : vector<1x128xf32> to vector<256x128xf32>
    %5 = arith.addf %2, %4 : vector<256x128xf32>
    %6 = math.tanh %5 : vector<256x128xf32>
    %7 = arith.truncf %6 : vector<256x128xf32> to vector<256x128xbf16>
    %c0_5 = arith.constant 0 : index
    %c0_6 = arith.constant 0 : index
    %8 = vector.load %arg4[%c0_5, %c0_6] : memref<128x128xbf16, #tpu.memory_space<vmem>>, vector<128x128xbf16>
    %cst_7 = arith.constant dense<0.000000e+00> : vector<256x128xf32>
    %9 = tpu.matmul %7, %8, %cst_7 {dimension_numbers = #tpu.dot_dimension_numbers<[1], [0], [0], [1], [0, 0, 1, 1], [], []>} : vector<256x128xbf16>, vector<128x128xbf16>, vector<256x128xf32> -> vector<256x128xf32>
    %c0_8 = arith.constant 0 : index
    %c0_9 = arith.constant 0 : index
    %10 = vector.load %arg5[%c0_8, %c0_9] : memref<1x128xf32, #tpu.memory_space<vmem>>, vector<1x128xf32>
    %11 = vector.broadcast %10 : vector<1x128xf32> to vector<256x128xf32>
    %12 = arith.addf %9, %11 : vector<256x128xf32>
    %cst_10 = arith.constant 0.000000e+00 : f32
    %13 = vector.broadcast %cst_10 : f32 to vector<256x128xf32>
    %14 = arith.cmpf oge, %12, %13 : vector<256x128xf32>
    %cst_11 = arith.constant 0.00999999977 : f32
    %15 = vector.broadcast %cst_11 : f32 to vector<256x128xf32>
    %16 = arith.mulf %15, %12 : vector<256x128xf32>
    %17 = arith.select %14, %12, %16 : vector<256x128xi1>, vector<256x128xf32>
    %18 = arith.truncf %17 : vector<256x128xf32> to vector<256x128xbf16>
    %c0_12 = arith.constant 0 : index
    %c0_13 = arith.constant 0 : index
    %19 = vector.load %arg6[%c0_12, %c0_13] : memref<128x128xbf16, #tpu.memory_space<vmem>>, vector<128x128xbf16>
    %cst_14 = arith.constant dense<0.000000e+00> : vector<256x128xf32>
    %20 = tpu.matmul %18, %19, %cst_14 {dimension_numbers = #tpu.dot_dimension_numbers<[1], [0], [0], [1], [0, 0, 1, 1], [], []>} : vector<256x128xbf16>, vector<128x128xbf16>, vector<256x128xf32> -> vector<256x128xf32>
    %c0_15 = arith.constant 0 : index
    %c0_16 = arith.constant 0 : index
    %21 = vector.load %arg7[%c0_15, %c0_16] : memref<1x128xf32, #tpu.memory_space<vmem>>, vector<1x128xf32>
    %22 = vector.broadcast %21 : vector<1x128xf32> to vector<256x128xf32>
    %23 = arith.addf %20, %22 : vector<256x128xf32>
    %24 = math.tanh %23 : vector<256x128xf32>
    %c0_17 = arith.constant 0 : index
    %c0_18 = arith.constant 0 : index
    %25 = vector.load %arg8[%c0_17, %c0_18] : memref<256x128xf32, #tpu.memory_space<vmem>>, vector<256x128xf32>
    tpu.vector_store %arg8[%c0_17, %c0_18], %24 {strides = array<i32>} : memref<256x128xf32, #tpu.memory_space<vmem>>, vector<256x128xf32>,
    return
  }
  func.func @transform_0(%arg0: i32) -> (i32, i32) {
    %c0_i32 = arith.constant 0 : i32
    %c0_i32_0 = arith.constant 0 : i32
    return %arg0, %c0_i32 : i32, i32
  }
  func.func @transform_1(%arg0: i32) -> (i32, i32) {
    %c0_i32 = arith.constant 0 : i32
    %c0_i32_0 = arith.constant 0 : i32
    %c0_i32_1 = arith.constant 0 : i32
    return %c0_i32, %c0_i32_0 : i32, i32
  }
  func.func @transform_2(%arg0: i32) -> (i32, i32) {
    %c0_i32 = arith.constant 0 : i32
    %c0_i32_0 = arith.constant 0 : i32
    %c0_i32_1 = arith.constant 0 : i32
    return %c0_i32, %c0_i32_0 : i32, i32
  }
  func.func @transform_3(%arg0: i32) -> (i32, i32) {
    %c0_i32 = arith.constant 0 : i32
    %c0_i32_0 = arith.constant 0 : i32
    %c0_i32_1 = arith.constant 0 : i32
    return %c0_i32, %c0_i32_0 : i32, i32
  }
  func.func @transform_4(%arg0: i32) -> (i32, i32) {
    %c0_i32 = arith.constant 0 : i32
    %c0_i32_0 = arith.constant 0 : i32
    %c0_i32_1 = arith.constant 0 : i32
    return %c0_i32, %c0_i32_0 : i32, i32
  }
  func.func @transform_5(%arg0: i32) -> (i32, i32) {
    %c0_i32 = arith.constant 0 : i32
    %c0_i32_0 = arith.constant 0 : i32
    %c0_i32_1 = arith.constant 0 : i32
    return %c0_i32, %c0_i32_0 : i32, i32
  }
  func.func @transform_6(%arg0: i32) -> (i32, i32) {
    %c0_i32 = arith.constant 0 : i32
    %c0_i32_0 = arith.constant 0 : i32
    %c0_i32_1 = arith.constant 0 : i32
    return %c0_i32, %c0_i32_0 : i32, i32
  }
  func.func @transform_7(%arg0: i32) -> (i32, i32) {
    %c0_i32 = arith.constant 0 : i32
    %c0_i32_0 = arith.constant 0 : i32
    return %arg0, %c0_i32 : i32, i32
  }
}

</mosaic_0001>

<llo_original>
// kernel: net_forward.1
$region0: #{net_forward.1}
  #allocation0 [shape = 'u32[]', space=smem, size = 0x4, offset = 0x4, fixed_abs, tag = 'smem constant byte address 0x4 - core index']
  #allocation1 [shape = 'u32[144,128]{1,0:T(1,128)}', space=vmem, size = 0x12000, scoped, tag = 'internal scratch']
  %s0 = inlined_call_operand.vmem [shape: bf16[512,128], index: 0, kind: input, shape index: {}]
  %s1 = inlined_call_operand.vmem [shape: bf16[128,128], index: 1, kind: input, shape index: {}]
  %s2 = inlined_call_operand.vmem [shape: f32[1,128], index: 2, kind: input, shape index: {}]
  %s3 = inlined_call_operand.vmem [shape: bf16[128,128], index: 3, kind: input, shape index: {}]
  %s4 = inlined_call_operand.vmem [shape: f32[1,128], index: 4, kind: input, shape index: {}]
  %s5 = inlined_call_operand.vmem [shape: bf16[128,128], index: 5, kind: input, shape index: {}]
  %s6 = inlined_call_operand.vmem [shape: f32[1,128], index: 6, kind: input, shape index: {}]
  %s7 = inlined_call_operand.vmem [shape: f32[512,128], index: 7, kind: output, shape index: {}]
  %s8 = sld [smem:[#allocation0]]
  $region61: #{net_forward.1} parent=0
    _
  %s10 = ssub.s32 1, %s8
  %s11 = scalar_select 0, %s10, %s8
  loop: start=0, step=1, limit=4
  $region2: #{net_forward.1} parent=0 // loop_pre_header
    _
  $region3: #{net_forward.1} parent=0 // loop_header
    %s13 = sphi 0, %s17
    %p14 = scmp.ge.s32.totalorder %s13, 4
    %s23 = sphi 0, %s25
    %s26 = sphi 0, %s23
    %s27 = sphi 0, %s26
    %s43 = sphi 0, %s27
    %s47 = sphi 0, %s47
    %s49 = sphi 0, %s47
    %s50 = sphi 0, %s49
    %s64 = sphi 0, %s50
    %s68 = sphi 0, %s68
    %s70 = sphi 0, %s68
    %s71 = sphi 0, %s70
    %s85 = sphi 0, %s71
    %s89 = sphi 0, %s89
    %s91 = sphi 0, %s89
    %s92 = sphi 0, %s91
    %s106 = sphi 0, %s92
    %s110 = sphi 0, %s110
    %s112 = sphi 0, %s110
    %s113 = sphi 0, %s112
    %s127 = sphi 0, %s113
    %s131 = sphi 0, %s131
    %s133 = sphi 0, %s131
    %s134 = sphi 0, %s133
    %s148 = sphi 0, %s134
    %s152 = sphi 0, %s152
    %s154 = sphi 0, %s152
    %s155 = sphi 0, %s154
    %s169 = sphi 0, %s155
    %s175 = sphi 0, %s177
    %s178 = sphi 0, %s175
    %s179 = sphi 0, %s178
    %s195 = sphi 0, %s179
  $region4: #{net_forward.1} parent=0 // loop_header_branch
    %16 = sbr.rel (%p14) target = $region8
  $region5: #{net_forward.1} parent=0 // loop_body
    %s18 = ssub.s32 %s13, 1
    %s19 = ssub.s32 %s13, 2
    %s20 = sadd.s32 %s13, 1
    %s21 = ssub.s32 %s13, %s20
    %p22 = scmp.eq.s32.totalorder %s21, 0
    %s24 = sadd.s32 %s23, 1
    %s25 = scalar_select %p22, %s23, %s24
    %p28 = pneg %p22
    %p29 = scmp.eq.s32.totalorder %s13, 1
    %p30 = por %p28, %p29
    %p31 = scmp.ne.s32.totalorder %s23, %s26
    %p32 = scmp.eq.s32.totalorder %s13, 0
    %p33 = por %p31, %p32
    %p34 = scmp.ne.s32.totalorder %s23, %s26
    %p35 = scmp.eq.s32.totalorder %s18, 1
    %p36 = por %p34, %p35
    %p37 = scmp.ne.s32.totalorder %s26, %s27
    %p38 = scmp.eq.s32.totalorder %s18, 0
    %p39 = por %p37, %p38
    %p40 = scmp.ne.s32.totalorder %s26, %s27
    %p41 = scmp.eq.s32.totalorder %s19, 1
    %p42 = por %p40, %p41
    %p44 = scmp.ne.s32.totalorder %s27, %s43
    %p45 = scmp.eq.s32.totalorder %s19, 0
    %p46 = por %p44, %p45
    %s48 = sadd.s32 %s47, 1
    %p51 = scmp.eq.s32.totalorder %s13, 1
    %p52 = scmp.ne.s32.totalorder %s47, %s49
    %p53 = scmp.eq.s32.totalorder %s13, 0
    %p54 = por %p52, %p53
    %p55 = scmp.ne.s32.totalorder %s47, %s49
    %p56 = scmp.eq.s32.totalorder %s18, 1
    %p57 = por %p55, %p56
    %p58 = scmp.ne.s32.totalorder %s49, %s50
    %p59 = scmp.eq.s32.totalorder %s18, 0
    %p60 = por %p58, %p59
    %p61 = scmp.ne.s32.totalorder %s49, %s50
    %p62 = scmp.eq.s32.totalorder %s19, 1
    %p63 = por %p61, %p62
    %p65 = scmp.ne.s32.totalorder %s50, %s64
    %p66 = scmp.eq.s32.totalorder %s19, 0
    %p67 = por %p65, %p66
    %s69 = sadd.s32 %s68, 1
    %p72 = scmp.eq.s32.totalorder %s13, 1
    %p73 = scmp.ne.s32.totalorder %s68, %s70
    %p74 = scmp.eq.s32.totalorder %s13, 0
    %p75 = por %p73, %p74
    %p76 = scmp.ne.s32.totalorder %s68, %s70
    %p77 = scmp.eq.s32.totalorder %s18, 1
    %p78 = por %p76, %p77
    %p79 = scmp.ne.s32.totalorder %s70, %s71
    %p80 = scmp.eq.s32.totalorder %s18, 0
    %p81 = por %p79, %p80
    %p82 = scmp.ne.s32.totalorder %s70, %s71
    %p83 = scmp.eq.s32.totalorder %s19, 1
    %p84 = por %p82, %p83
    %p86 = scmp.ne.s32.totalorder %s71, %s85
    %p87 = scmp.eq.s32.totalorder %s19, 0
    %p88 = por %p86, %p87
    %s90 = sadd.s32 %s89, 1
    %p93 = scmp.eq.s32.totalorder %s13, 1
    %p94 = scmp.ne.s32.totalorder %s89, %s91
    %p95 = scmp.eq.s32.totalorder %s13, 0
    %p96 = por %p94, %p95
    %p97 = scmp.ne.s32.totalorder %s89, %s91
    %p98 = scmp.eq.s32.totalorder %s18, 1
    %p99 = por %p97, %p98
    %p100 = scmp.ne.s32.totalorder %s91, %s92
    %p101 = scmp.eq.s32.totalorder %s18, 0
    %p102 = por %p100, %p101
    %p103 = scmp.ne.s32.totalorder %s91, %s92
    %p104 = scmp.eq.s32.totalorder %s19, 1
    %p105 = por %p103, %p104
    %p107 = scmp.ne.s32.totalorder %s92, %s106
    %p108 = scmp.eq.s32.totalorder %s19, 0
    %p109 = por %p107, %p108
    %s111 = sadd.s32 %s110, 1
    %p114 = scmp.eq.s32.totalorder %s13, 1
    %p115 = scmp.ne.s32.totalorder %s110, %s112
    %p116 = scmp.eq.s32.totalorder %s13, 0
    %p117 = por %p115, %p116
    %p118 = scmp.ne.s32.totalorder %s110, %s112
    %p119 = scmp.eq.s32.totalorder %s18, 1
    %p120 = por %p118, %p119
    %p121 = scmp.ne.s32.totalorder %s112, %s113
    %p122 = scmp.eq.s32.totalorder %s18, 0
    %p123 = por %p121, %p122
    %p124 = scmp.ne.s32.totalorder %s112, %s113
    %p125 = scmp.eq.s32.totalorder %s19, 1
    %p126 = por %p124, %p125
    %p128 = scmp.ne.s32.totalorder %s113, %s127
    %p129 = scmp.eq.s32.totalorder %s19, 0
    %p130 = por %p128, %p129
    %s132 = sadd.s32 %s131, 1
    %p135 = scmp.eq.s32.totalorder %s13, 1
    %p136 = scmp.ne.s32.totalorder %s131, %s133
    %p137 = scmp.eq.s32.totalorder %s13, 0
    %p138 = por %p136, %p137
    %p139 = scmp.ne.s32.totalorder %s131, %s133
    %p140 = scmp.eq.s32.totalorder %s18, 1
    %p141 = por %p139, %p140
    %p142 = scmp.ne.s32.totalorder %s133, %s134
    %p143 = scmp.eq.s32.totalorder %s18, 0
    %p144 = por %p142, %p143
    %p145 = scmp.ne.s32.totalorder %s133, %s134
    %p146 = scmp.eq.s32.totalorder %s19, 1
    %p147 = por %p145, %p146
    %p149 = scmp.ne.s32.totalorder %s134, %s148
    %p150 = scmp.eq.s32.totalorder %s19, 0
    %p151 = por %p149, %p150
    %s153 = sadd.s32 %s152, 1
    %p156 = scmp.eq.s32.totalorder %s13, 1
    %p157 = scmp.ne.s32.totalorder %s152, %s154
    %p158 = scmp.eq.s32.totalorder %s13, 0
    %p159 = por %p157, %p158
    %p160 = scmp.ne.s32.totalorder %s152, %s154
    %p161 = scmp.eq.s32.totalorder %s18, 1
    %p162 = por %p160, %p161
    %p163 = scmp.ne.s32.totalorder %s154, %s155
    %p164 = scmp.eq.s32.totalorder %s18, 0
    %p165 = por %p163, %p164
    %p166 = scmp.ne.s32.totalorder %s154, %s155
    %p167 = scmp.eq.s32.totalorder %s19, 1
    %p168 = por %p166, %p167
    %p170 = scmp.ne.s32.totalorder %s155, %s169
    %p171 = scmp.eq.s32.totalorder %s19, 0
    %p172 = por %p170, %p171
    %s173 = ssub.s32 %s13, %s20
    %p174 = scmp.eq.s32.totalorder %s173, 0
    %s176 = sadd.s32 %s175, 1
    %s177 = scalar_select %p174, %s175, %s176
    %p180 = pneg %p174
    %p181 = scmp.eq.s32.totalorder %s13, 1
    %p182 = por %p180, %p181
    %p183 = scmp.ne.s32.totalorder %s175, %s178
    %p184 = scmp.eq.s32.totalorder %s13, 0
    %p185 = por %p183, %p184
    %p186 = scmp.ne.s32.totalorder %s175, %s178
    %p187 = scmp.eq.s32.totalorder %s18, 1
    %p188 = por %p186, %p187
    %p189 = scmp.ne.s32.totalorder %s178, %s179
    %p190 = scmp.eq.s32.totalorder %s18, 0
    %p191 = por %p189, %p190
    %p192 = scmp.ne.s32.totalorder %s178, %s179
    %p193 = scmp.eq.s32.totalorder %s19, 1
    %p194 = por %p192, %p193
    %p196 = scmp.ne.s32.totalorder %s179, %s195
    %p197 = scmp.eq.s32.totalorder %s19, 0
    %p198 = por %p196, %p197
    %p199 = scmp.le.s32.totalorder 1, %s13
    %p200 = scmp.lt.s32.totalorder %s13, 3
    %p201 = pnand %p199, %p200
    %p202 = pneg %p201
    // Predicated region
    $region9: #{net_forward.1} parent=5 // pred_check
      _
    $region10: #{net_forward.1} parent=5 // pred_check_branch
      %204 = sbr.rel (%p201) target = $region12
    $region11: #{net_forward.1} parent=5 // pred_region
      %s205 = ssub.s32 %s13, 1
      // Predicated region
      $region13: #{net_forward.1} parent=11 // pred_check
        %p206 = pneg %p60
      $region14: #{net_forward.1} parent=11 // pred_check_branch
        %208 = sbr.rel (%p206) target = $region16
      $region15: #{net_forward.1} parent=11 // pred_region
        _
      $region16: #{net_forward.1} parent=11 // pred_fallthru
        _
      // Predicated region
      $region17: #{net_forward.1} parent=11 // pred_check
        %p209 = pneg %p81
      $region18: #{net_forward.1} parent=11 // pred_check_branch
        %211 = sbr.rel (%p209) target = $region20
      $region19: #{net_forward.1} parent=11 // pred_region
        _
      $region20: #{net_forward.1} parent=11 // pred_fallthru
        _
      // Predicated region
      $region21: #{net_forward.1} parent=11 // pred_check
        %p212 = pneg %p102
      $region22: #{net_forward.1} parent=11 // pred_check_branch
        %214 = sbr.rel (%p212) target = $region24
      $region23: #{net_forward.1} parent=11 // pred_region
        _
      $region24: #{net_forward.1} parent=11 // pred_fallthru
        _
      // Predicated region
      $region25: #{net_forward.1} parent=11 // pred_check
        %p215 = pneg %p123
      $region26: #{net_forward.1} parent=11 // pred_check_branch
        %217 = sbr.rel (%p215) target = $region28
      $region27: #{net_forward.1} parent=11 // pred_region
        _
      $region28: #{net_forward.1} parent=11 // pred_fallthru
        _
      // Predicated region
      $region29: #{net_forward.1} parent=11 // pred_check
        %p218 = pneg %p144
      $region30: #{net_forward.1} parent=11 // pred_check_branch
        %220 = sbr.rel (%p218) target = $region32
      $region31: #{net_forward.1} parent=11 // pred_region
        _
      $region32: #{net_forward.1} parent=11 // pred_fallthru
        _
      // Predicated region
      $region33: #{net_forward.1} parent=11 // pred_check
        %p221 = pneg %p165
      $region34: #{net_forward.1} parent=11 // pred_check_branch
        %223 = sbr.rel (%p221) target = $region36
      $region35: #{net_forward.1} parent=11 // pred_region
        _
      $region36: #{net_forward.1} parent=11 // pred_fallthru
        _
    $region12: #{net_forward.1} parent=5 // pred_fallthru
      _
    %p224 = scmp.lt.s32.totalorder %s13, 2
    // Predicated region
    $region37: #{net_forward.1} parent=5 // pred_check
      %p225 = pneg %p224
    $region38: #{net_forward.1} parent=5 // pred_check_branch
      %227 = sbr.rel (%p225) target = $region40
    $region39: #{net_forward.1} parent=5 // pred_region
      // Predicated region
      $region41: #{net_forward.1} parent=39 // pred_check
        %p228 = pneg %p33
      $region42: #{net_forward.1} parent=39 // pred_check_branch
        %230 = sbr.rel (%p228) target = $region44
      $region43: #{net_forward.1} parent=39 // pred_region
        %s231 = smul.u32 32, %s13
        %p232 = scmp.lt.s32.totalorder %s231, 63
        %s233 = scalar_select %p232, %s231, 63
        %s234 = smul.addr %s233, 4
        %s235 = scalar_lea.vmem %s0, %s234
        %s236 = smul.u32 32, %s13
      $region44: #{net_forward.1} parent=39 // pred_fallthru
        _
    $region40: #{net_forward.1} parent=5 // pred_fallthru
      _
    %p237 = scmp.le.s32.totalorder 1, %s13
    %p238 = scmp.lt.s32.totalorder %s13, 3
    %p239 = pnand %p237, %p238
    %p240 = pneg %p239
    // Predicated region
    $region45: #{net_forward.1} parent=5 // pred_check
      _
    $region46: #{net_forward.1} parent=5 // pred_check_branch
      %242 = sbr.rel (%p239) target = $region48
    $region47: #{net_forward.1} parent=5 // pred_region
      %s243 = ssub.s32 %s13, 1
      %s244 = smul.u32 32, %s18
      %p245 = scmp.lt.s32.totalorder %s244, 63
      %s246 = scalar_select %p245, %s244, 63
      %s247 = smul.addr %s246, 4
      %s248 = scalar_lea.vmem %s0, %s247
      %p249 = pneg %p39
      %p250 = pneg %p36
      %p251 = pneg %p60
      %p252 = pneg %p57
      %p253 = pneg %p81
      %p254 = pneg %p78
      %p255 = pneg %p102
      %p256 = pneg %p99
      %p257 = pneg %p123
      %p258 = pneg %p120
      %p259 = pneg %p144
      %p260 = pneg %p141
      %p261 = pneg %p165
      %p262 = pneg %p162
      %p263 = pneg %p191
      %p264 = pneg %p188
      %s265 = smul.u32 32, %s18
      %p266 = scmp.lt.s32.totalorder %s265, 63
      %s267 = scalar_select %p266, %s265, 63
      %s268 = smul.addr %s267, 8
      %s269 = scalar_lea.vmem %s7, %s268
      %s270 = smul.u32 32, %s18
      %p271 = scmp.lt.s32.totalorder %s270, 63
      %s272 = scalar_select %p271, %s270, 63
      %s273 = smul.addr %s272, 4
      %s274 = scalar_lea.vmem %s0, %s273
      %s275 = smul.u32 32, %s18
      %s276 = smul.u32 32, %s18
      %p277 = scmp.lt.s32.totalorder %s276, 63
      %s278 = scalar_select %p277, %s276, 63
      %s279 = smul.addr %s278, 8
      %s280 = scalar_lea.vmem %s7, %s279
      %s281 = smul.u32 32, %s18
      %v283 = vld [vmem:[%s274] sm:$0xf]
      %v284 = vld [vmem:[%s274 + $0x4] sm:$0xf]
      %v285 = vld [vmem:[%s274 + $0x8] sm:$0xf]
      %v286 = vld [vmem:[%s274 + $0xc] sm:$0xf]
      %v287 = vld [vmem:[%s274 + $0x10] sm:$0xf]
      %v288 = vld [vmem:[%s274 + $0x14] sm:$0xf]
      %v289 = vld [vmem:[%s274 + $0x18] sm:$0xf]
      %v290 = vld [vmem:[%s274 + $0x1c] sm:$0xf]
      %v291 = vld [vmem:[%s274 + $0x20] sm:$0xf]
      %v292 = vld [vmem:[%s274 + $0x24] sm:$0xf]
      %v293 = vld [vmem:[%s274 + $0x28] sm:$0xf]
      %v294 = vld [vmem:[%s274 + $0x2c] sm:$0xf]
      %v295 = vld [vmem:[%s274 + $0x30] sm:$0xf]
      %v296 = vld [vmem:[%s274 + $0x34] sm:$0xf]
      %v297 = vld [vmem:[%s274 + $0x38] sm:$0xf]
      %v298 = vld [vmem:[%s274 + $0x3c] sm:$0xf]
      %v299 = vld [vmem:[%s274 + $0x40] sm:$0xf]
      %v300 = vld [vmem:[%s274 + $0x44] sm:$0xf]
      %v301 = vld [vmem:[%s274 + $0x48] sm:$0xf]
      %v302 = vld [vmem:[%s274 + $0x4c] sm:$0xf]
      %v303 = vld [vmem:[%s274 + $0x50] sm:$0xf]
      %v304 = vld [vmem:[%s274 + $0x54] sm:$0xf]
      %v305 = vld [vmem:[%s274 + $0x58] sm:$0xf]
      %v306 = vld [vmem:[%s274 + $0x5c] sm:$0xf]
      %v307 = vld [vmem:[%s274 + $0x60] sm:$0xf]
      %v308 = vld [vmem:[%s274 + $0x64] sm:$0xf]
      %v309 = vld [vmem:[%s274 + $0x68] sm:$0xf]
      %v310 = vld [vmem:[%s274 + $0x6c] sm:$0xf]
      %v311 = vld [vmem:[%s274 + $0x70] sm:$0xf]
      %v312 = vld [vmem:[%s274 + $0x74] sm:$0xf]
      %v313 = vld [vmem:[%s274 + $0x78] sm:$0xf]
      %v314 = vld [vmem:[%s274 + $0x7c] sm:$0xf]
      %v315 = vld [vmem:[%s1] sm:$0xf]
      %v316 = vld [vmem:[%s1 + $0x4] sm:$0xf]
      %v317 = vld [vmem:[%s1 + $0x8] sm:$0xf]
      %v318 = vld [vmem:[%s1 + $0xc] sm:$0xf]
      %v319 = vld [vmem:[%s1 + $0x10] sm:$0xf]
      %v320 = vld [vmem:[%s1 + $0x14] sm:$0xf]
      %v321 = vld [vmem:[%s1 + $0x18] sm:$0xf]
      %v322 = vld [vmem:[%s1 + $0x1c] sm:$0xf]
      %v323 = vld [vmem:[%s1 + $0x20] sm:$0xf]
      %v324 = vld [vmem:[%s1 + $0x24] sm:$0xf]
      %v325 = vld [vmem:[%s1 + $0x28] sm:$0xf]
      %v326 = vld [vmem:[%s1 + $0x2c] sm:$0xf]
      %v327 = vld [vmem:[%s1 + $0x30] sm:$0xf]
      %v328 = vld [vmem:[%s1 + $0x34] sm:$0xf]
      %v329 = vld [vmem:[%s1 + $0x38] sm:$0xf]
      %v330 = vld [vmem:[%s1 + $0x3c] sm:$0xf]
      %v331 = vld [vmem:[%s2] sm:$0x1]
      %v333 = vlaneseq
      %v334 = vshrl.u32 %v333, 7
      %v335 = vsub.s32 0, %v334
      %v336 = vrot.slane %v331, %v335
      %v370 = vunpack.c.l.b16 %v283
      %v371 = vunpack.c.l.b16 %v284
      %v372 = vunpack.c.l.b16 %v285
      %v373 = vunpack.c.l.b16 %v286
      %v374 = vunpack.c.l.b16 %v287
      %v375 = vunpack.c.l.b16 %v288
      %v376 = vunpack.c.l.b16 %v289
      %v377 = vunpack.c.l.b16 %v290
      %v378 = vunpack.c.l.b16 %v291
      %v379 = vunpack.c.l.b16 %v292
      %v380 = vunpack.c.l.b16 %v293
      %v381 = vunpack.c.l.b16 %v294
      %v382 = vunpack.c.l.b16 %v295
      %v383 = vunpack.c.l.b16 %v296
      %v384 = vunpack.c.l.b16 %v297
      %v385 = vunpack.c.l.b16 %v298
      %v386 = vunpack.c.l.b16 %v299
      %v387 = vunpack.c.l.b16 %v300
      %v388 = vunpack.c.l.b16 %v301
      %v389 = vunpack.c.l.b16 %v302
      %v390 = vunpack.c.l.b16 %v303
      %v391 = vunpack.c.l.b16 %v304
      %v392 = vunpack.c.l.b16 %v305
      %v393 = vunpack.c.l.b16 %v306
      %v394 = vunpack.c.l.b16 %v307
      %v395 = vunpack.c.l.b16 %v308
      %v396 = vunpack.c.l.b16 %v309
      %v397 = vunpack.c.l.b16 %v310
      %v398 = vunpack.c.l.b16 %v311
      %v399 = vunpack.c.l.b16 %v312
      %v400 = vunpack.c.l.b16 %v313
      %v401 = vunpack.c.l.b16 %v314
      %v402 = vpack.c.b16 %v371, %v370
      %v403 = vpack.c.b16 %v373, %v372
      %v404 = vpack.c.b16 %v375, %v374
      %v405 = vpack.c.b16 %v377, %v376
      %v406 = vpack.c.b16 %v379, %v378
      %v407 = vpack.c.b16 %v381, %v380
      %v408 = vpack.c.b16 %v383, %v382
      %v409 = vpack.c.b16 %v385, %v384
      %v410 = vpack.c.b16 %v387, %v386
      %v411 = vpack.c.b16 %v389, %v388
      %v412 = vpack.c.b16 %v391, %v390
      %v413 = vpack.c.b16 %v393, %v392
      %v414 = vpack.c.b16 %v395, %v394
      %v415 = vpack.c.b16 %v397, %v396
      %v416 = vpack.c.b16 %v399, %v398
      %v417 = vpack.c.b16 %v401, %v400
      %v450 = vunpack.c.l.b16 %v315
      %v451 = vunpack.c.l.b16 %v316
      %v452 = vunpack.c.l.b16 %v317
      %v453 = vunpack.c.l.b16 %v318
      %v454 = vunpack.c.l.b16 %v319
      %v455 = vunpack.c.l.b16 %v320
      %v456 = vunpack.c.l.b16 %v321
      %v457 = vunpack.c.l.b16 %v322
      %v458 = vunpack.c.l.b16 %v323
      %v459 = vunpack.c.l.b16 %v324
      %v460 = vunpack.c.l.b16 %v325
      %v461 = vunpack.c.l.b16 %v326
      %v462 = vunpack.c.l.b16 %v327
      %v463 = vunpack.c.l.b16 %v328
      %v464 = vunpack.c.l.b16 %v329
      %v465 = vunpack.c.l.b16 %v330
      %v466 = vpack.c.b16 %v451, %v450
      %v467 = vpack.c.b16 %v453, %v452
      %v468 = vpack.c.b16 %v455, %v454
      %v469 = vpack.c.b16 %v457, %v456
      %v470 = vpack.c.b16 %v459, %v458
      %v471 = vpack.c.b16 %v461, %v460
      %v472 = vpack.c.b16 %v463, %v462
      %v473 = vpack.c.b16 %v465, %v464
      %482 = vmatprep.subr.bf16.mxu0 0
      %483 = vmatpush1.bf16.msra.mxu0 %v466
      %484 = vmatprep.subr.bf16.mxu0 0
      %485 = vmatpush1.bf16.msra.mxu0 %v467
      %486 = vmatprep.subr.bf16.mxu0 0
      %487 = vmatpush1.bf16.msra.mxu0 %v468
      %488 = vmatprep.subr.bf16.mxu0 0
      %489 = vmatpush1.bf16.msra.mxu0 %v469
      %490 = vmatprep.subr.bf16.mxu0 0
      %491 = vmatpush1.bf16.msra.mxu0 %v470
      %492 = vmatprep.subr.bf16.mxu0 0
      %493 = vmatpush1.bf16.msra.mxu0 %v471
      %494 = vmatprep.subr.bf16.mxu0 0
      %495 = vmatpush1.bf16.msra.mxu0 %v472
      %496 = vmatprep.subr.bf16.mxu0 0
      %497 = vmatpush1.bf16.msra.mxu0 %v473
      %498 = vmatprep.subr.bf16.mxu0 0
      %499 = vmatpush1.bf16.msra.mxu0 0
      %500 = vmatprep.subr.bf16.mxu0 0
      %501 = vmatpush1.bf16.msra.mxu0 0
      %502 = vmatprep.subr.bf16.mxu0 0
      %503 = vmatpush1.bf16.msra.mxu0 0
      %504 = vmatprep.subr.bf16.mxu0 0
      %505 = vmatpush1.bf16.msra.mxu0 0
      %506 = vmatprep.subr.bf16.mxu0 0
      %507 = vmatpush1.bf16.msra.mxu0 0
      %508 = vmatprep.subr.bf16.mxu0 0
      %509 = vmatpush1.bf16.msra.mxu0 0
      %510 = vmatprep.subr.bf16.mxu0 0
      %511 = vmatpush1.bf16.msra.mxu0 0
      %512 = vmatprep.subr.bf16.mxu0 0
      %513 = vmatpush1.bf16.msra.mxu0 0
      %514 = vmatprep.mubr.bf16.mxu0 0
      %515 = vmatmul.mubr.bf16.gmra.mrb[0].mxu0 %v402
      %v516 = vpop.f32.mrb[0].mxu0
      %v517 = vadd.f32 %v336, %v516
      %v518 = vpop.f32.mrb[0].mxu0
      %v519 = vpop.f32.mrb[0].mxu0
      %v520 = vadd.f32 %v336, %v519
      %v521 = vpop.f32.mrb[0].mxu0
      %522 = vmatprep.mubr.bf16.mxu0 0
      %523 = vmatmul.mubr.bf16.gmra.mrb[0].mxu0 %v403
      %v524 = vpop.f32.mrb[0].mxu0
      %v525 = vadd.f32 %v336, %v524
      %v526 = vpop.f32.mrb[0].mxu0
      %v527 = vpop.f32.mrb[0].mxu0
      %v528 = vadd.f32 %v336, %v527
      %v529 = vpop.f32.mrb[0].mxu0
      %530 = vmatprep.mubr.bf16.mxu0 0
      %531 = vmatmul.mubr.bf16.gmra.mrb[0].mxu0 %v404
      %v532 = vpop.f32.mrb[0].mxu0
      %v533 = vadd.f32 %v336, %v532
      %v534 = vpop.f32.mrb[0].mxu0
      %v535 = vpop.f32.mrb[0].mxu0
      %v536 = vadd.f32 %v336, %v535
      %v537 = vpop.f32.mrb[0].mxu0
      %538 = vmatprep.mubr.bf16.mxu0 0
      %539 = vmatmul.mubr.bf16.gmra.mrb[0].mxu0 %v405
      %v540 = vpop.f32.mrb[0].mxu0
      %v541 = vadd.f32 %v336, %v540
      %v542 = vpop.f32.mrb[0].mxu0
      %v543 = vpop.f32.mrb[0].mxu0
      %v544 = vadd.f32 %v336, %v543
      %v545 = vpop.f32.mrb[0].mxu0
      %546 = vmatprep.mubr.bf16.mxu0 0
      %547 = vmatmul.mubr.bf16.gmra.mrb[0].mxu0 %v406
      %v548 = vpop.f32.mrb[0].mxu0
      %v549 = vadd.f32 %v336, %v548
      %v550 = vpop.f32.mrb[0].mxu0
      %v551 = vpop.f32.mrb[0].mxu0
      %v552 = vadd.f32 %v336, %v551
      %v553 = vpop.f32.mrb[0].mxu0
      %554 = vmatprep.mubr.bf16.mxu0 0
      %555 = vmatmul.mubr.bf16.gmra.mrb[0].mxu0 %v407
      %v556 = vpop.f32.mrb[0].mxu0
      %v557 = vadd.f32 %v336, %v556
      %v558 = vpop.f32.mrb[0].mxu0
      %v559 = vpop.f32.mrb[0].mxu0
      %v560 = vadd.f32 %v336, %v559
      %v561 = vpop.f32.mrb[0].mxu0
      %562 = vmatprep.mubr.bf16.mxu0 0
      %563 = vmatmul.mubr.bf16.gmra.mrb[0].mxu0 %v408
      %v564 = vpop.f32.mrb[0].mxu0
      %v565 = vadd.f32 %v336, %v564
      %v566 = vpop.f32.mrb[0].mxu0
      %v567 = vpop.f32.mrb[0].mxu0
      %v568 = vadd.f32 %v336, %v567
      %v569 = vpop.f32.mrb[0].mxu0
      %570 = vmatprep.mubr.bf16.mxu0 0
      %571 = vmatmul.mubr.bf16.gmra.mrb[0].mxu0 %v409
      %v572 = vpop.f32.mrb[0].mxu0
      %v573 = vadd.f32 %v336, %v572
      %v574 = vpop.f32.mrb[0].mxu0
      %v575 = vpop.f32.mrb[0].mxu0
      %v576 = vadd.f32 %v336, %v575
      %v577 = vpop.f32.mrb[0].mxu0
      %578 = vmatprep.mubr.bf16.mxu0 0
      %579 = vmatmul.mubr.bf16.gmra.mrb[0].mxu0 %v410
      %v580 = vpop.f32.mrb[0].mxu0
      %v581 = vadd.f32 %v336, %v580
      %v582 = vpop.f32.mrb[0].mxu0
      %v583 = vpop.f32.mrb[0].mxu0
      %v584 = vadd.f32 %v336, %v583
      %v585 = vpop.f32.mrb[0].mxu0
      %586 = vmatprep.mubr.bf16.mxu0 0
      %587 = vmatmul.mubr.bf16.gmra.mrb[0].mxu0 %v411
      %v588 = vpop.f32.mrb[0].mxu0
      %v589 = vadd.f32 %v336, %v588
      %v590 = vpop.f32.mrb[0].mxu0
      %v591 = vpop.f32.mrb[0].mxu0
      %v592 = vadd.f32 %v336, %v591
      %v593 = vpop.f32.mrb[0].mxu0
      %594 = vmatprep.mubr.bf16.mxu0 0
      %595 = vmatmul.mubr.bf16.gmra.mrb[0].mxu0 %v412
      %v596 = vpop.f32.mrb[0].mxu0
      %v597 = vadd.f32 %v336, %v596
      %v598 = vpop.f32.mrb[0].mxu0
      %v599 = vpop.f32.mrb[0].mxu0
      %v600 = vadd.f32 %v336, %v599
      %v601 = vpop.f32.mrb[0].mxu0
      %602 = vmatprep.mubr.bf16.mxu0 0
      %603 = vmatmul.mubr.bf16.gmra.mrb[0].mxu0 %v413
      %v604 = vpop.f32.mrb[0].mxu0
      %v605 = vadd.f32 %v336, %v604
      %v606 = vpop.f32.mrb[0].mxu0
      %v607 = vpop.f32.mrb[0].mxu0
      %v608 = vadd.f32 %v336, %v607
      %v609 = vpop.f32.mrb[0].mxu0
      %610 = vmatprep.mubr.bf16.mxu0 0
      %611 = vmatmul.mubr.bf16.gmra.mrb[0].mxu0 %v414
      %v612 = vpop.f32.mrb[0].mxu0
      %v613 = vadd.f32 %v336, %v612
      %v614 = vpop.f32.mrb[0].mxu0
      %v615 = vpop.f32.mrb[0].mxu0
      %v616 = vadd.f32 %v336, %v615
      %v617 = vpop.f32.mrb[0].mxu0
      %618 = vmatprep.mubr.bf16.mxu0 0
      %619 = vmatmul.mubr.bf16.gmra.mrb[0].mxu0 %v415
      %v620 = vpop.f32.mrb[0].mxu0
      %v621 = vadd.f32 %v336, %v620
      %v622 = vpop.f32.mrb[0].mxu0
      %v623 = vpop.f32.mrb[0].mxu0
      %v624 = vadd.f32 %v336, %v623
      %v625 = vpop.f32.mrb[0].mxu0
      %626 = vmatprep.mubr.bf16.mxu0 0
      %627 = vmatmul.mubr.bf16.gmra.mrb[0].mxu0 %v416
      %v628 = vpop.f32.mrb[0].mxu0
      %v629 = vadd.f32 %v336, %v628
      %v630 = vpop.f32.mrb[0].mxu0
      %v631 = vpop.f32.mrb[0].mxu0
      %v632 = vadd.f32 %v336, %v631
      %v633 = vpop.f32.mrb[0].mxu0
      %634 = vmatprep.mubr.bf16.mxu0 0
      %635 = vmatmul.mubr.bf16.gmra.mrb[0].mxu0 %v417
      %v636 = vpop.f32.mrb[0].mxu0
      %v637 = vadd.f32 %v336, %v636
      %v638 = vpop.f32.mrb[0].mxu0
      %v639 = vpop.f32.mrb[0].mxu0
      %v640 = vadd.f32 %v336, %v639
      %v641 = vpop.f32.mrb[0].mxu0
      %642 = vdwg.mxu0
      %v643 = vtanh.pop %v517
      %v644 = vtanh.pop %v520
      %v645 = vtanh.pop %v525
      %v646 = vtanh.pop %v528
      %v647 = vtanh.pop %v533
      %v648 = vtanh.pop %v536
      %v649 = vtanh.pop %v541
      %v650 = vtanh.pop %v544
      %v651 = vtanh.pop %v549
      %v652 = vtanh.pop %v552
      %v653 = vtanh.pop %v557
      %v654 = vtanh.pop %v560
      %v655 = vtanh.pop %v565
      %v656 = vtanh.pop %v568
      %v657 = vtanh.pop %v573
      %v658 = vtanh.pop %v576
      %v659 = vtanh.pop %v581
      %v660 = vtanh.pop %v584
      %v661 = vtanh.pop %v589
      %v662 = vtanh.pop %v592
      %v663 = vtanh.pop %v597
      %v664 = vtanh.pop %v600
      %v665 = vtanh.pop %v605
      %v666 = vtanh.pop %v608
      %v667 = vtanh.pop %v613
      %v668 = vtanh.pop %v616
      %v669 = vtanh.pop %v621
      %v670 = vtanh.pop %v624
      %v671 = vtanh.pop %v629
      %v672 = vtanh.pop %v632
      %v673 = vtanh.pop %v637
      %v674 = vtanh.pop %v640
      %v675 = vpack.c.bf16 %v644, %v643
      %v676 = vpack.c.bf16 %v646, %v645
      %v677 = vpack.c.bf16 %v648, %v647
      %v678 = vpack.c.bf16 %v650, %v649
      %v679 = vpack.c.bf16 %v652, %v651
      %v680 = vpack.c.bf16 %v654, %v653
      %v681 = vpack.c.bf16 %v656, %v655
      %v682 = vpack.c.bf16 %v658, %v657
      %v683 = vpack.c.bf16 %v660, %v659
      %v684 = vpack.c.bf16 %v662, %v661
      %v685 = vpack.c.bf16 %v664, %v663
      %v686 = vpack.c.bf16 %v666, %v665
      %v687 = vpack.c.bf16 %v668, %v667
      %v688 = vpack.c.bf16 %v670, %v669
      %v689 = vpack.c.bf16 %v672, %v671
      %v690 = vpack.c.bf16 %v674, %v673
      %v691 = vld [vmem:[%s3] sm:$0xf]
      %v692 = vld [vmem:[%s3 + $0x4] sm:$0xf]
      %v693 = vld [vmem:[%s3 + $0x8] sm:$0xf]
      %v694 = vld [vmem:[%s3 + $0xc] sm:$0xf]
      %v695 = vld [vmem:[%s3 + $0x10] sm:$0xf]
      %v696 = vld [vmem:[%s3 + $0x14] sm:$0xf]
      %v697 = vld [vmem:[%s3 + $0x18] sm:$0xf]
      %v698 = vld [vmem:[%s3 + $0x1c] sm:$0xf]
      %v699 = vld [vmem:[%s3 + $0x20] sm:$0xf]
      %v700 = vld [vmem:[%s3 + $0x24] sm:$0xf]
      %v701 = vld [vmem:[%s3 + $0x28] sm:$0xf]
      %v702 = vld [vmem:[%s3 + $0x2c] sm:$0xf]
      %v703 = vld [vmem:[%s3 + $0x30] sm:$0xf]
      %v704 = vld [vmem:[%s3 + $0x34] sm:$0xf]
      %v705 = vld [vmem:[%s3 + $0x38] sm:$0xf]
      %v706 = vld [vmem:[%s3 + $0x3c] sm:$0xf]
      %v707 = vld [vmem:[%s4] sm:$0x1]
      %v709 = vlaneseq
      %v710 = vshrl.u32 %v709, 7
      %v711 = vsub.s32 0, %v710
      %v712 = vrot.slane %v707, %v711
      %v730 = vunpack.c.l.b16 %v691
      %v731 = vunpack.c.l.b16 %v692
      %v732 = vunpack.c.l.b16 %v693
      %v733 = vunpack.c.l.b16 %v694
      %v734 = vunpack.c.l.b16 %v695
      %v735 = vunpack.c.l.b16 %v696
      %v736 = vunpack.c.l.b16 %v697
      %v737 = vunpack.c.l.b16 %v698
      %v738 = vunpack.c.l.b16 %v699
      %v739 = vunpack.c.l.b16 %v700
      %v740 = vunpack.c.l.b16 %v701
      %v741 = vunpack.c.l.b16 %v702
      %v742 = vunpack.c.l.b16 %v703
      %v743 = vunpack.c.l.b16 %v704
      %v744 = vunpack.c.l.b16 %v705
      %v745 = vunpack.c.l.b16 %v706
      %v746 = vpack.c.b16 %v731, %v730
      %v747 = vpack.c.b16 %v733, %v732
      %v748 = vpack.c.b16 %v735, %v734
      %v749 = vpack.c.b16 %v737, %v736
      %v750 = vpack.c.b16 %v739, %v738
      %v751 = vpack.c.b16 %v741, %v740
      %v752 = vpack.c.b16 %v743, %v742
      %v753 = vpack.c.b16 %v745, %v744
      %762 = vmatprep.subr.bf16.mxu0 0
      %763 = vmatpush1.bf16.msra.mxu0 %v746
      %764 = vmatprep.subr.bf16.mxu0 0
      %765 = vmatpush1.bf16.msra.mxu0 %v747
      %766 = vmatprep.subr.bf16.mxu0 0
      %767 = vmatpush1.bf16.msra.mxu0 %v748
      %768 = vmatprep.subr.bf16.mxu0 0
      %769 = vmatpush1.bf16.msra.mxu0 %v749
      %770 = vmatprep.subr.bf16.mxu0 0
      %771 = vmatpush1.bf16.msra.mxu0 %v750
      %772 = vmatprep.subr.bf16.mxu0 0
      %773 = vmatpush1.bf16.msra.mxu0 %v751
      %774 = vmatprep.subr.bf16.mxu0 0
      %775 = vmatpush1.bf16.msra.mxu0 %v752
      %776 = vmatprep.subr.bf16.mxu0 0
      %777 = vmatpush1.bf16.msra.mxu0 %v753
      %778 = vmatprep.subr.bf16.mxu0 0
      %779 = vmatpush1.bf16.msra.mxu0 0
      %780 = vmatprep.subr.bf16.mxu0 0
      %781 = vmatpush1.bf16.msra.mxu0 0
      %782 = vmatprep.subr.bf16.mxu0 0
      %783 = vmatpush1.bf16.msra.mxu0 0
      %784 = vmatprep.subr.bf16.mxu0 0
      %785 = vmatpush1.bf16.msra.mxu0 0
      %786 = vmatprep.subr.bf16.mxu0 0
      %787 = vmatpush1.bf16.msra.mxu0 0
      %788 = vmatprep.subr.bf16.mxu0 0
      %789 = vmatpush1.bf16.msra.mxu0 0
      %790 = vmatprep.subr.bf16.mxu0 0
      %791 = vmatpush1.bf16.msra.mxu0 0
      %792 = vmatprep.subr.bf16.mxu0 0
      %793 = vmatpush1.bf16.msra.mxu0 0
      %794 = vmatprep.mubr.bf16.mxu0 0
      %795 = vmatmul.mubr.bf16.gmra.mrb[0].mxu0 %v675
      %v796 = vpop.f32.mrb[0].mxu0
      %v797 = vadd.f32 %v712, %v796
      %v798 = vpop.f32.mrb[0].mxu0
      %v799 = vpop.f32.mrb[0].mxu0
      %v800 = vadd.f32 %v712, %v799
      %v801 = vpop.f32.mrb[0].mxu0
      %802 = vmatprep.mubr.bf16.mxu0 0
      %803 = vmatmul.mubr.bf16.gmra.mrb[0].mxu0 %v676
      %v804 = vpop.f32.mrb[0].mxu0
      %v805 = vadd.f32 %v712, %v804
      %v806 = vpop.f32.mrb[0].mxu0
      %v807 = vpop.f32.mrb[0].mxu0
      %v808 = vadd.f32 %v712, %v807
      %v809 = vpop.f32.mrb[0].mxu0
      %810 = vmatprep.mubr.bf16.mxu0 0
      %811 = vmatmul.mubr.bf16.gmra.mrb[0].mxu0 %v677
      %v812 = vpop.f32.mrb[0].mxu0
      %v813 = vadd.f32 %v712, %v812
      %v814 = vpop.f32.mrb[0].mxu0
      %v815 = vpop.f32.mrb[0].mxu0
      %v816 = vadd.f32 %v712, %v815
      %v817 = vpop.f32.mrb[0].mxu0
      %818 = vmatprep.mubr.bf16.mxu0 0
      %819 = vmatmul.mubr.bf16.gmra.mrb[0].mxu0 %v678
      %v820 = vpop.f32.mrb[0].mxu0
      %v821 = vadd.f32 %v712, %v820
      %v822 = vpop.f32.mrb[0].mxu0
      %v823 = vpop.f32.mrb[0].mxu0
      %v824 = vadd.f32 %v712, %v823
      %v825 = vpop.f32.mrb[0].mxu0
      %826 = vmatprep.mubr.bf16.mxu0 0
      %827 = vmatmul.mubr.bf16.gmra.mrb[0].mxu0 %v679
      %v828 = vpop.f32.mrb[0].mxu0
      %v829 = vadd.f32 %v712, %v828
      %v830 = vpop.f32.mrb[0].mxu0
      %v831 = vpop.f32.mrb[0].mxu0
      %v832 = vadd.f32 %v712, %v831
      %v833 = vpop.f32.mrb[0].mxu0
      %834 = vmatprep.mubr.bf16.mxu0 0
      %835 = vmatmul.mubr.bf16.gmra.mrb[0].mxu0 %v680
      %v836 = vpop.f32.mrb[0].mxu0
      %v837 = vadd.f32 %v712, %v836
      %v838 = vpop.f32.mrb[0].mxu0
      %v839 = vpop.f32.mrb[0].mxu0
      %v840 = vadd.f32 %v712, %v839
      %v841 = vpop.f32.mrb[0].mxu0
      %842 = vmatprep.mubr.bf16.mxu0 0
      %843 = vmatmul.mubr.bf16.gmra.mrb[0].mxu0 %v681
      %v844 = vpop.f32.mrb[0].mxu0
      %v845 = vadd.f32 %v712, %v844
      %v846 = vpop.f32.mrb[0].mxu0
      %v847 = vpop.f32.mrb[0].mxu0
      %v848 = vadd.f32 %v712, %v847
      %v849 = vpop.f32.mrb[0].mxu0
      %850 = vmatprep.mubr.bf16.mxu0 0
      %851 = vmatmul.mubr.bf16.gmra.mrb[0].mxu0 %v682
      %v852 = vpop.f32.mrb[0].mxu0
      %v853 = vadd.f32 %v712, %v852
      %v854 = vpop.f32.mrb[0].mxu0
      %v855 = vpop.f32.mrb[0].mxu0
      %v856 = vadd.f32 %v712, %v855
      %v857 = vpop.f32.mrb[0].mxu0
      %858 = vmatprep.mubr.bf16.mxu0 0
      %859 = vmatmul.mubr.bf16.gmra.mrb[0].mxu0 %v683
      %v860 = vpop.f32.mrb[0].mxu0
      %v861 = vadd.f32 %v712, %v860
      %v862 = vpop.f32.mrb[0].mxu0
      %v863 = vpop.f32.mrb[0].mxu0
      %v864 = vadd.f32 %v712, %v863
      %v865 = vpop.f32.mrb[0].mxu0
      %866 = vmatprep.mubr.bf16.mxu0 0
      %867 = vmatmul.mubr.bf16.gmra.mrb[0].mxu0 %v684
      %v868 = vpop.f32.mrb[0].mxu0
      %v869 = vadd.f32 %v712, %v868
      %v870 = vpop.f32.mrb[0].mxu0
      %v871 = vpop.f32.mrb[0].mxu0
      %v872 = vadd.f32 %v712, %v871
      %v873 = vpop.f32.mrb[0].mxu0
      %874 = vmatprep.mubr.bf16.mxu0 0
      %875 = vmatmul.mubr.bf16.gmra.mrb[0].mxu0 %v685
      %v876 = vpop.f32.mrb[0].mxu0
      %v877 = vadd.f32 %v712, %v876
      %v878 = vpop.f32.mrb[0].mxu0
      %v879 = vpop.f32.mrb[0].mxu0
      %v880 = vadd.f32 %v712, %v879
      %v881 = vpop.f32.mrb[0].mxu0
      %882 = vmatprep.mubr.bf16.mxu0 0
      %883 = vmatmul.mubr.bf16.gmra.mrb[0].mxu0 %v686
      %v884 = vpop.f32.mrb[0].mxu0
      %v885 = vadd.f32 %v712, %v884
      %v886 = vpop.f32.mrb[0].mxu0
      %v887 = vpop.f32.mrb[0].mxu0
      %v888 = vadd.f32 %v712, %v887
      %v889 = vpop.f32.mrb[0].mxu0
      %890 = vmatprep.mubr.bf16.mxu0 0
      %891 = vmatmul.mubr.bf16.gmra.mrb[0].mxu0 %v687
      %v892 = vpop.f32.mrb[0].mxu0
      %v893 = vadd.f32 %v712, %v892
      %v894 = vpop.f32.mrb[0].mxu0
      %v895 = vpop.f32.mrb[0].mxu0
      %v896 = vadd.f32 %v712, %v895
      %v897 = vpop.f32.mrb[0].mxu0
      %898 = vmatprep.mubr.bf16.mxu0 0
      %899 = vmatmul.mubr.bf16.gmra.mrb[0].mxu0 %v688
      %v900 = vpop.f32.mrb[0].mxu0
      %v901 = vadd.f32 %v712, %v900
      %v902 = vpop.f32.mrb[0].mxu0
      %v903 = vpop.f32.mrb[0].mxu0
      %v904 = vadd.f32 %v712, %v903
      %v905 = vpop.f32.mrb[0].mxu0
      %906 = vmatprep.mubr.bf16.mxu0 0
      %907 = vmatmul.mubr.bf16.gmra.mrb[0].mxu0 %v689
      %v908 = vpop.f32.mrb[0].mxu0
      %v909 = vadd.f32 %v712, %v908
      %v910 = vpop.f32.mrb[0].mxu0
      %v911 = vpop.f32.mrb[0].mxu0
      %v912 = vadd.f32 %v712, %v911
      %v913 = vpop.f32.mrb[0].mxu0
      %914 = vmatprep.mubr.bf16.mxu0 0
      %915 = vmatmul.mubr.bf16.gmra.mrb[0].mxu0 %v690
      %v916 = vpop.f32.mrb[0].mxu0
      %v917 = vadd.f32 %v712, %v916
      %v918 = vpop.f32.mrb[0].mxu0
      %v919 = vpop.f32.mrb[0].mxu0
      %v920 = vadd.f32 %v712, %v919
      %v921 = vpop.f32.mrb[0].mxu0
      %922 = vdwg.mxu0
      %vm923 = vcmp.ge.f32.partialorder %v797, 0.0
      %vm924 = vcmp.ge.f32.partialorder %v800, 0.0
      %vm925 = vcmp.ge.f32.partialorder %v805, 0.0
      %vm926 = vcmp.ge.f32.partialorder %v808, 0.0
      %vm927 = vcmp.ge.f32.partialorder %v813, 0.0
      %vm928 = vcmp.ge.f32.partialorder %v816, 0.0
      %vm929 = vcmp.ge.f32.partialorder %v821, 0.0
      %vm930 = vcmp.ge.f32.partialorder %v824, 0.0
      %vm931 = vcmp.ge.f32.partialorder %v829, 0.0
      %vm932 = vcmp.ge.f32.partialorder %v832, 0.0
      %vm933 = vcmp.ge.f32.partialorder %v837, 0.0
      %vm934 = vcmp.ge.f32.partialorder %v840, 0.0
      %vm935 = vcmp.ge.f32.partialorder %v845, 0.0
      %vm936 = vcmp.ge.f32.partialorder %v848, 0.0
      %vm937 = vcmp.ge.f32.partialorder %v853, 0.0
      %vm938 = vcmp.ge.f32.partialorder %v856, 0.0
      %vm939 = vcmp.ge.f32.partialorder %v861, 0.0
      %vm940 = vcmp.ge.f32.partialorder %v864, 0.0
      %vm941 = vcmp.ge.f32.partialorder %v869, 0.0
      %vm942 = vcmp.ge.f32.partialorder %v872, 0.0
      %vm943 = vcmp.ge.f32.partialorder %v877, 0.0
      %vm944 = vcmp.ge.f32.partialorder %v880, 0.0
      %vm945 = vcmp.ge.f32.partialorder %v885, 0.0
      %vm946 = vcmp.ge.f32.partialorder %v888, 0.0
      %vm947 = vcmp.ge.f32.partialorder %v893, 0.0
      %vm948 = vcmp.ge.f32.partialorder %v896, 0.0
      %vm949 = vcmp.ge.f32.partialorder %v901, 0.0
      %vm950 = vcmp.ge.f32.partialorder %v904, 0.0
      %vm951 = vcmp.ge.f32.partialorder %v909, 0.0
      %vm952 = vcmp.ge.f32.partialorder %v912, 0.0
      %vm953 = vcmp.ge.f32.partialorder %v917, 0.0
      %vm954 = vcmp.ge.f32.partialorder %v920, 0.0
      %v955 = vmul.f32 %v797, 0.01
      %v956 = vmul.f32 %v800, 0.01
      %v957 = vmul.f32 %v805, 0.01
      %v958 = vmul.f32 %v808, 0.01
      %v959 = vmul.f32 %v813, 0.01
      %v960 = vmul.f32 %v816, 0.01
      %v961 = vmul.f32 %v821, 0.01
      %v962 = vmul.f32 %v824, 0.01
      %v963 = vmul.f32 %v829, 0.01
      %v964 = vmul.f32 %v832, 0.01
      %v965 = vmul.f32 %v837, 0.01
      %v966 = vmul.f32 %v840, 0.01
      %v967 = vmul.f32 %v845, 0.01
      %v968 = vmul.f32 %v848, 0.01
      %v969 = vmul.f32 %v853, 0.01
      %v970 = vmul.f32 %v856, 0.01
      %v971 = vmul.f32 %v861, 0.01
      %v972 = vmul.f32 %v864, 0.01
      %v973 = vmul.f32 %v869, 0.01
      %v974 = vmul.f32 %v872, 0.01
      %v975 = vmul.f32 %v877, 0.01
      %v976 = vmul.f32 %v880, 0.01
      %v977 = vmul.f32 %v885, 0.01
      %v978 = vmul.f32 %v888, 0.01
      %v979 = vmul.f32 %v893, 0.01
      %v980 = vmul.f32 %v896, 0.01
      %v981 = vmul.f32 %v901, 0.01
      %v982 = vmul.f32 %v904, 0.01
      %v983 = vmul.f32 %v909, 0.01
      %v984 = vmul.f32 %v912, 0.01
      %v985 = vmul.f32 %v917, 0.01
      %v986 = vmul.f32 %v920, 0.01
      %v987 = vsel %vm923, %v797, %v955
      %v988 = vsel %vm924, %v800, %v956
      %v989 = vsel %vm925, %v805, %v957
      %v990 = vsel %vm926, %v808, %v958
      %v991 = vsel %vm927, %v813, %v959
      %v992 = vsel %vm928, %v816, %v960
      %v993 = vsel %vm929, %v821, %v961
      %v994 = vsel %vm930, %v824, %v962
      %v995 = vsel %vm931, %v829, %v963
      %v996 = vsel %vm932, %v832, %v964
      %v997 = vsel %vm933, %v837, %v965
      %v998 = vsel %vm934, %v840, %v966
      %v999 = vsel %vm935, %v845, %v967
      %v1000 = vsel %vm936, %v848, %v968
      %v1001 = vsel %vm937, %v853, %v969
      %v1002 = vsel %vm938, %v856, %v970
      %v1003 = vsel %vm939, %v861, %v971
      %v1004 = vsel %vm940, %v864, %v972
      %v1005 = vsel %vm941, %v869, %v973
      %v1006 = vsel %vm942, %v872, %v974
      %v1007 = vsel %vm943, %v877, %v975
      %v1008 = vsel %vm944, %v880, %v976
      %v1009 = vsel %vm945, %v885, %v977
      %v1010 = vsel %vm946, %v888, %v978
      %v1011 = vsel %vm947, %v893, %v979
      %v1012 = vsel %vm948, %v896, %v980
      %v1013 = vsel %vm949, %v901, %v981
      %v1014 = vsel %vm950, %v904, %v982
      %v1015 = vsel %vm951, %v909, %v983
      %v1016 = vsel %vm952, %v912, %v984
      %v1017 = vsel %vm953, %v917, %v985
      %v1018 = vsel %vm954, %v920, %v986
      %v1019 = vpack.c.bf16 %v988, %v987
      %v1020 = vpack.c.bf16 %v990, %v989
      %v1021 = vpack.c.bf16 %v992, %v991
      %v1022 = vpack.c.bf16 %v994, %v993
      %v1023 = vpack.c.bf16 %v996, %v995
      %v1024 = vpack.c.bf16 %v998, %v997
      %v1025 = vpack.c.bf16 %v1000, %v999
      %v1026 = vpack.c.bf16 %v1002, %v1001
      %v1027 = vpack.c.bf16 %v1004, %v1003
      %v1028 = vpack.c.bf16 %v1006, %v1005
      %v1029 = vpack.c.bf16 %v1008, %v1007
      %v1030 = vpack.c.bf16 %v1010, %v1009
      %v1031 = vpack.c.bf16 %v1012, %v1011
      %v1032 = vpack.c.bf16 %v1014, %v1013
      %v1033 = vpack.c.bf16 %v1016, %v1015
      %v1034 = vpack.c.bf16 %v1018, %v1017
      %v1035 = vld [vmem:[%s5] sm:$0xf]
      %v1036 = vld [vmem:[%s5 + $0x4] sm:$0xf]
      %v1037 = vld [vmem:[%s5 + $0x8] sm:$0xf]
      %v1038 = vld [vmem:[%s5 + $0xc] sm:$0xf]
      %v1039 = vld [vmem:[%s5 + $0x10] sm:$0xf]
      %v1040 = vld [vmem:[%s5 + $0x14] sm:$0xf]
      %v1041 = vld [vmem:[%s5 + $0x18] sm:$0xf]
      %v1042 = vld [vmem:[%s5 + $0x1c] sm:$0xf]
      %v1043 = vld [vmem:[%s5 + $0x20] sm:$0xf]
      %v1044 = vld [vmem:[%s5 + $0x24] sm:$0xf]
      %v1045 = vld [vmem:[%s5 + $0x28] sm:$0xf]
      %v1046 = vld [vmem:[%s5 + $0x2c] sm:$0xf]
      %v1047 = vld [vmem:[%s5 + $0x30] sm:$0xf]
      %v1048 = vld [vmem:[%s5 + $0x34] sm:$0xf]
      %v1049 = vld [vmem:[%s5 + $0x38] sm:$0xf]
      %v1050 = vld [vmem:[%s5 + $0x3c] sm:$0xf]
      %v1051 = vld [vmem:[%s6] sm:$0x1]
      %v1053 = vlaneseq
      %v1054 = vshrl.u32 %v1053, 7
      %v1055 = vsub.s32 0, %v1054
      %v1056 = vrot.slane %v1051, %v1055
      %v1074 = vunpack.c.l.b16 %v1035
      %v1075 = vunpack.c.l.b16 %v1036
      %v1076 = vunpack.c.l.b16 %v1037
      %v1077 = vunpack.c.l.b16 %v1038
      %v1078 = vunpack.c.l.b16 %v1039
      %v1079 = vunpack.c.l.b16 %v1040
      %v1080 = vunpack.c.l.b16 %v1041
      %v1081 = vunpack.c.l.b16 %v1042
      %v1082 = vunpack.c.l.b16 %v1043
      %v1083 = vunpack.c.l.b16 %v1044
      %v1084 = vunpack.c.l.b16 %v1045
      %v1085 = vunpack.c.l.b16 %v1046
      %v1086 = vunpack.c.l.b16 %v1047
      %v1087 = vunpack.c.l.b16 %v1048
      %v1088 = vunpack.c.l.b16 %v1049
      %v1089 = vunpack.c.l.b16 %v1050
      %v1090 = vpack.c.b16 %v1075, %v1074
      %v1091 = vpack.c.b16 %v1077, %v1076
      %v1092 = vpack.c.b16 %v1079, %v1078
      %v1093 = vpack.c.b16 %v1081, %v1080
      %v1094 = vpack.c.b16 %v1083, %v1082
      %v1095 = vpack.c.b16 %v1085, %v1084
      %v1096 = vpack.c.b16 %v1087, %v1086
      %v1097 = vpack.c.b16 %v1089, %v1088
      %1106 = vmatprep.subr.bf16.mxu0 0
      %1107 = vmatpush1.bf16.msra.mxu0 %v1090
      %1108 = vmatprep.subr.bf16.mxu0 0
      %1109 = vmatpush1.bf16.msra.mxu0 %v1091
      %1110 = vmatprep.subr.bf16.mxu0 0
      %1111 = vmatpush1.bf16.msra.mxu0 %v1092
      %1112 = vmatprep.subr.bf16.mxu0 0
      %1113 = vmatpush1.bf16.msra.mxu0 %v1093
      %1114 = vmatprep.subr.bf16.mxu0 0
      %1115 = vmatpush1.bf16.msra.mxu0 %v1094
      %1116 = vmatprep.subr.bf16.mxu0 0
      %1117 = vmatpush1.bf16.msra.mxu0 %v1095
      %1118 = vmatprep.subr.bf16.mxu0 0
      %1119 = vmatpush1.bf16.msra.mxu0 %v1096
      %1120 = vmatprep.subr.bf16.mxu0 0
      %1121 = vmatpush1.bf16.msra.mxu0 %v1097
      %1122 = vmatprep.subr.bf16.mxu0 0
      %1123 = vmatpush1.bf16.msra.mxu0 0
      %1124 = vmatprep.subr.bf16.mxu0 0
      %1125 = vmatpush1.bf16.msra.mxu0 0
      %1126 = vmatprep.subr.bf16.mxu0 0
      %1127 = vmatpush1.bf16.msra.mxu0 0
      %1128 = vmatprep.subr.bf16.mxu0 0
      %1129 = vmatpush1.bf16.msra.mxu0 0
      %1130 = vmatprep.subr.bf16.mxu0 0
      %1131 = vmatpush1.bf16.msra.mxu0 0
      %1132 = vmatprep.subr.bf16.mxu0 0
      %1133 = vmatpush1.bf16.msra.mxu0 0
      %1134 = vmatprep.subr.bf16.mxu0 0
      %1135 = vmatpush1.bf16.msra.mxu0 0
      %1136 = vmatprep.subr.bf16.mxu0 0
      %1137 = vmatpush1.bf16.msra.mxu0 0
      %1138 = vmatprep.mubr.bf16.mxu0 0
      %1139 = vmatmul.mubr.bf16.gmra.mrb[0].mxu0 %v1019
      %v1140 = vpop.f32.mrb[0].mxu0
      %v1141 = vadd.f32 %v1056, %v1140
      %v1142 = vpop.f32.mrb[0].mxu0
      %v1143 = vpop.f32.mrb[0].mxu0
      %v1144 = vadd.f32 %v1056, %v1143
      %v1145 = vpop.f32.mrb[0].mxu0
      %1146 = vmatprep.mubr.bf16.mxu0 0
      %1147 = vmatmul.mubr.bf16.gmra.mrb[0].mxu0 %v1020
      %v1148 = vpop.f32.mrb[0].mxu0
      %v1149 = vadd.f32 %v1056, %v1148
      %v1150 = vpop.f32.mrb[0].mxu0
      %v1151 = vpop.f32.mrb[0].mxu0
      %v1152 = vadd.f32 %v1056, %v1151
      %v1153 = vpop.f32.mrb[0].mxu0
      %1154 = vmatprep.mubr.bf16.mxu0 0
      %1155 = vmatmul.mubr.bf16.gmra.mrb[0].mxu0 %v1021
      %v1156 = vpop.f32.mrb[0].mxu0
      %v1157 = vadd.f32 %v1056, %v1156
      %v1158 = vpop.f32.mrb[0].mxu0
      %v1159 = vpop.f32.mrb[0].mxu0
      %v1160 = vadd.f32 %v1056, %v1159
      %v1161 = vpop.f32.mrb[0].mxu0
      %1162 = vmatprep.mubr.bf16.mxu0 0
      %1163 = vmatmul.mubr.bf16.gmra.mrb[0].mxu0 %v1022
      %v1164 = vpop.f32.mrb[0].mxu0
      %v1165 = vadd.f32 %v1056, %v1164
      %v1166 = vpop.f32.mrb[0].mxu0
      %v1167 = vpop.f32.mrb[0].mxu0
      %v1168 = vadd.f32 %v1056, %v1167
      %v1169 = vpop.f32.mrb[0].mxu0
      %1170 = vmatprep.mubr.bf16.mxu0 0
      %1171 = vmatmul.mubr.bf16.gmra.mrb[0].mxu0 %v1023
      %v1172 = vpop.f32.mrb[0].mxu0
      %v1173 = vadd.f32 %v1056, %v1172
      %v1174 = vpop.f32.mrb[0].mxu0
      %v1175 = vpop.f32.mrb[0].mxu0
      %v1176 = vadd.f32 %v1056, %v1175
      %v1177 = vpop.f32.mrb[0].mxu0
      %1178 = vmatprep.mubr.bf16.mxu0 0
      %1179 = vmatmul.mubr.bf16.gmra.mrb[0].mxu0 %v1024
      %v1180 = vpop.f32.mrb[0].mxu0
      %v1181 = vadd.f32 %v1056, %v1180
      %v1182 = vpop.f32.mrb[0].mxu0
      %v1183 = vpop.f32.mrb[0].mxu0
      %v1184 = vadd.f32 %v1056, %v1183
      %v1185 = vpop.f32.mrb[0].mxu0
      %1186 = vmatprep.mubr.bf16.mxu0 0
      %1187 = vmatmul.mubr.bf16.gmra.mrb[0].mxu0 %v1025
      %v1188 = vpop.f32.mrb[0].mxu0
      %v1189 = vadd.f32 %v1056, %v1188
      %v1190 = vpop.f32.mrb[0].mxu0
      %v1191 = vpop.f32.mrb[0].mxu0
      %v1192 = vadd.f32 %v1056, %v1191
      %v1193 = vpop.f32.mrb[0].mxu0
      %1194 = vmatprep.mubr.bf16.mxu0 0
      %1195 = vmatmul.mubr.bf16.gmra.mrb[0].mxu0 %v1026
      %v1196 = vpop.f32.mrb[0].mxu0
      %v1197 = vadd.f32 %v1056, %v1196
      %v1198 = vpop.f32.mrb[0].mxu0
      %v1199 = vpop.f32.mrb[0].mxu0
      %v1200 = vadd.f32 %v1056, %v1199
      %v1201 = vpop.f32.mrb[0].mxu0
      %1202 = vmatprep.mubr.bf16.mxu0 0
      %1203 = vmatmul.mubr.bf16.gmra.mrb[0].mxu0 %v1027
      %v1204 = vpop.f32.mrb[0].mxu0
      %v1205 = vadd.f32 %v1056, %v1204
      %v1206 = vpop.f32.mrb[0].mxu0
      %v1207 = vpop.f32.mrb[0].mxu0
      %v1208 = vadd.f32 %v1056, %v1207
      %v1209 = vpop.f32.mrb[0].mxu0
      %1210 = vmatprep.mubr.bf16.mxu0 0
      %1211 = vmatmul.mubr.bf16.gmra.mrb[0].mxu0 %v1028
      %v1212 = vpop.f32.mrb[0].mxu0
      %v1213 = vadd.f32 %v1056, %v1212
      %v1214 = vpop.f32.mrb[0].mxu0
      %v1215 = vpop.f32.mrb[0].mxu0
      %v1216 = vadd.f32 %v1056, %v1215
      %v1217 = vpop.f32.mrb[0].mxu0
      %1218 = vmatprep.mubr.bf16.mxu0 0
      %1219 = vmatmul.mubr.bf16.gmra.mrb[0].mxu0 %v1029
      %v1220 = vpop.f32.mrb[0].mxu0
      %v1221 = vadd.f32 %v1056, %v1220
      %v1222 = vpop.f32.mrb[0].mxu0
      %v1223 = vpop.f32.mrb[0].mxu0
      %v1224 = vadd.f32 %v1056, %v1223
      %v1225 = vpop.f32.mrb[0].mxu0
      %1226 = vmatprep.mubr.bf16.mxu0 0
      %1227 = vmatmul.mubr.bf16.gmra.mrb[0].mxu0 %v1030
      %v1228 = vpop.f32.mrb[0].mxu0
      %v1229 = vadd.f32 %v1056, %v1228
      %v1230 = vpop.f32.mrb[0].mxu0
      %v1231 = vpop.f32.mrb[0].mxu0
      %v1232 = vadd.f32 %v1056, %v1231
      %v1233 = vpop.f32.mrb[0].mxu0
      %1234 = vmatprep.mubr.bf16.mxu0 0
      %1235 = vmatmul.mubr.bf16.gmra.mrb[0].mxu0 %v1031
      %v1236 = vpop.f32.mrb[0].mxu0
      %v1237 = vadd.f32 %v1056, %v1236
      %v1238 = vpop.f32.mrb[0].mxu0
      %v1239 = vpop.f32.mrb[0].mxu0
      %v1240 = vadd.f32 %v1056, %v1239
      %v1241 = vpop.f32.mrb[0].mxu0
      %1242 = vmatprep.mubr.bf16.mxu0 0
      %1243 = vmatmul.mubr.bf16.gmra.mrb[0].mxu0 %v1032
      %v1244 = vpop.f32.mrb[0].mxu0
      %v1245 = vadd.f32 %v1056, %v1244
      %v1246 = vpop.f32.mrb[0].mxu0
      %v1247 = vpop.f32.mrb[0].mxu0
      %v1248 = vadd.f32 %v1056, %v1247
      %v1249 = vpop.f32.mrb[0].mxu0
      %1250 = vmatprep.mubr.bf16.mxu0 0
      %1251 = vmatmul.mubr.bf16.gmra.mrb[0].mxu0 %v1033
      %v1252 = vpop.f32.mrb[0].mxu0
      %v1253 = vadd.f32 %v1056, %v1252
      %v1254 = vpop.f32.mrb[0].mxu0
      %v1255 = vpop.f32.mrb[0].mxu0
      %v1256 = vadd.f32 %v1056, %v1255
      %v1257 = vpop.f32.mrb[0].mxu0
      %1258 = vmatprep.mubr.bf16.mxu0 0
      %1259 = vmatmul.mubr.bf16.gmra.mrb[0].mxu0 %v1034
      %v1260 = vpop.f32.mrb[0].mxu0
      %v1261 = vadd.f32 %v1056, %v1260
      %v1262 = vpop.f32.mrb[0].mxu0
      %v1263 = vpop.f32.mrb[0].mxu0
      %v1264 = vadd.f32 %v1056, %v1263
      %v1265 = vpop.f32.mrb[0].mxu0
      %1266 = vdwg.mxu0
      %v1267 = vtanh.pop %v1141
      %v1268 = vtanh.pop %v1144
      %v1269 = vtanh.pop %v1149
      %v1270 = vtanh.pop %v1152
      %v1271 = vtanh.pop %v1157
      %v1272 = vtanh.pop %v1160
      %v1273 = vtanh.pop %v1165
      %v1274 = vtanh.pop %v1168
      %v1275 = vtanh.pop %v1173
      %v1276 = vtanh.pop %v1176
      %v1277 = vtanh.pop %v1181
      %v1278 = vtanh.pop %v1184
      %v1279 = vtanh.pop %v1189
      %v1280 = vtanh.pop %v1192
      %v1281 = vtanh.pop %v1197
      %v1282 = vtanh.pop %v1200
      %v1283 = vtanh.pop %v1205
      %v1284 = vtanh.pop %v1208
      %v1285 = vtanh.pop %v1213
      %v1286 = vtanh.pop %v1216
      %v1287 = vtanh.pop %v1221
      %v1288 = vtanh.pop %v1224
      %v1289 = vtanh.pop %v1229
      %v1290 = vtanh.pop %v1232
      %v1291 = vtanh.pop %v1237
      %v1292 = vtanh.pop %v1240
      %v1293 = vtanh.pop %v1245
      %v1294 = vtanh.pop %v1248
      %v1295 = vtanh.pop %v1253
      %v1296 = vtanh.pop %v1256
      %v1297 = vtanh.pop %v1261
      %v1298 = vtanh.pop %v1264
      %1299 = vst [vmem:[%s280] sm:$0xff] %v1267
      %1300 = vst [vmem:[%s280 + $0x8] sm:$0xff] %v1268
      %1301 = vst [vmem:[%s280 + $0x10] sm:$0xff] %v1269
      %1302 = vst [vmem:[%s280 + $0x18] sm:$0xff] %v1270
      %1303 = vst [vmem:[%s280 + $0x20] sm:$0xff] %v1271
      %1304 = vst [vmem:[%s280 + $0x28] sm:$0xff] %v1272
      %1305 = vst [vmem:[%s280 + $0x30] sm:$0xff] %v1273
      %1306 = vst [vmem:[%s280 + $0x38] sm:$0xff] %v1274
      %1307 = vst [vmem:[%s280 + $0x40] sm:$0xff] %v1275
      %1308 = vst [vmem:[%s280 + $0x48] sm:$0xff] %v1276
      %1309 = vst [vmem:[%s280 + $0x50] sm:$0xff] %v1277
      %1310 = vst [vmem:[%s280 + $0x58] sm:$0xff] %v1278
      %1311 = vst [vmem:[%s280 + $0x60] sm:$0xff] %v1279
      %1312 = vst [vmem:[%s280 + $0x68] sm:$0xff] %v1280
      %1313 = vst [vmem:[%s280 + $0x70] sm:$0xff] %v1281
      %1314 = vst [vmem:[%s280 + $0x78] sm:$0xff] %v1282
      %1315 = vst [vmem:[%s280 + $0x80] sm:$0xff] %v1283
      %1316 = vst [vmem:[%s280 + $0x88] sm:$0xff] %v1284
      %1317 = vst [vmem:[%s280 + $0x90] sm:$0xff] %v1285
      %1318 = vst [vmem:[%s280 + $0x98] sm:$0xff] %v1286
      %1319 = vst [vmem:[%s280 + $0xa0] sm:$0xff] %v1287
      %1320 = vst [vmem:[%s280 + $0xa8] sm:$0xff] %v1288
      %1321 = vst [vmem:[%s280 + $0xb0] sm:$0xff] %v1289
      %1322 = vst [vmem:[%s280 + $0xb8] sm:$0xff] %v1290
      %1323 = vst [vmem:[%s280 + $0xc0] sm:$0xff] %v1291
      %1324 = vst [vmem:[%s280 + $0xc8] sm:$0xff] %v1292
      %1325 = vst [vmem:[%s280 + $0xd0] sm:$0xff] %v1293
      %1326 = vst [vmem:[%s280 + $0xd8] sm:$0xff] %v1294
      %1327 = vst [vmem:[%s280 + $0xe0] sm:$0xff] %v1295
      %1328 = vst [vmem:[%s280 + $0xe8] sm:$0xff] %v1296
      %1329 = vst [vmem:[%s280 + $0xf0] sm:$0xff] %v1297
      %1330 = vst [vmem:[%s280 + $0xf8] sm:$0xff] %v1298
      %s1331 = smul.u32 32, %s18
      %p1332 = scmp.lt.s32.totalorder %s1331, 63
      %s1333 = scalar_select %p1332, %s1331, 63
      %s1334 = smul.addr %s1333, 8
      %s1335 = scalar_lea.vmem %s7, %s1334
      // Predicated region
      $region49: #{net_forward.1} parent=47 // pred_check
        %p1336 = pneg %p188
      $region50: #{net_forward.1} parent=47 // pred_check_branch
        %1338 = sbr.rel (%p1336) target = $region52
      $region51: #{net_forward.1} parent=47 // pred_region
        %s1339 = smul.u32 32, %s18
      $region52: #{net_forward.1} parent=47 // pred_fallthru
        _
    $region48: #{net_forward.1} parent=5 // pred_fallthru
      _
    %p1340 = scmp.le.s32.totalorder 2, %s13
    // Predicated region
    $region53: #{net_forward.1} parent=5 // pred_check
      %p1341 = pneg %p1340
    $region54: #{net_forward.1} parent=5 // pred_check_branch
      %1343 = sbr.rel (%p1341) target = $region56
    $region55: #{net_forward.1} parent=5 // pred_region
      %s1344 = ssub.s32 %s13, 2
      // Predicated region
      $region57: #{net_forward.1} parent=55 // pred_check
        %p1345 = pneg %p194
      $region58: #{net_forward.1} parent=55 // pred_check_branch
        %1347 = sbr.rel (%p1345) target = $region60
      $region59: #{net_forward.1} parent=55 // pred_region
        %s1348 = smul.u32 32, %s19
        %p1349 = scmp.lt.s32.totalorder %s1348, 63
        %s1350 = scalar_select %p1349, %s1348, 63
        %s1351 = smul.addr %s1350, 8
        %s1352 = scalar_lea.vmem %s7, %s1351
      $region60: #{net_forward.1} parent=55 // pred_fallthru
        _
    $region56: #{net_forward.1} parent=5 // pred_fallthru
      _
  $region6: #{net_forward.1} parent=0 // loop_footer
    %s17 = sadd.s32 1, %s13
  $region7: #{net_forward.1} parent=0 // loop_footer_branch
    %12 = sbr.rel target = $region3
  $region8: #{net_forward.1} parent=0 // loop_exit
    _

</llo_original>
